<compile_context>
chip_gen: v7x
topology: tpu7x:2x2x1
jax: 0.10.0
libtpu: 0.0.40
codegen_flags: <defaults>
</compile_context>

<pallas_src>
import functools

import jax
import jax.numpy as jnp
from jax.experimental import pallas as pl
from jax.experimental.pallas import tpu as pltpu


def _round_up(x: int, m: int) -> int:
    return (x + m - 1) // m * m


def _cdiv(a: int, b: int) -> int:
    return (a + b - 1) // b


def _choose_tile_rows(B: int, C: int, block_rows: int) -> int:
    """Batch-tile rows: ~4 MiB of f32 logits per step, >=2 steps when possible."""
    target_bytes = 4 * 1024 * 1024
    rows = max(8, (target_bytes // max(1, C * 4)) // 8 * 8)
    rows = min(rows, block_rows)
    # At least two grid steps when the batch allows it (v7x has 2 TensorCores).
    rows = min(rows, _round_up(_cdiv(B, 2), 8))
    rows = min(rows, _round_up(B, 8))
    return max(8, rows)


def _supcon_kernel(y_pred_ref, labels_ref, loss_ref):
    # Upcast in-kernel: bf16 logits can be streamed from HBM, compute in f32
    # (mandatory on v5e's VPU/EUP, numerically safer everywhere).
    y_pred = y_pred_ref[...].astype(jnp.float32)      # [TB, C]
    labels = labels_ref[...]                           # [TB, 1] int32
    tb, c = y_pred.shape

    # One-hot via lane-iota compare (VPU); no materialized one-hot matrix.
    class_ids = jax.lax.broadcasted_iota(jnp.int32, (tb, c), 1)
    onehot = class_ids == labels                       # [TB, C] bool

    # Label-column logit (exactly one hot per row under valid labels).
    pos_logit = jnp.sum(jnp.where(onehot, y_pred, 0.0),
                        axis=1, keepdims=True)         # [TB, 1]

    # Stabilized logsumexp over classes: single full-tile exp pass.
    row_max = jnp.max(y_pred, axis=1, keepdims=True)   # [TB, 1]  (XLU)
    sum_exp = jnp.sum(jnp.exp(y_pred - row_max),        # [TB, C]  (EUP)
                      axis=1, keepdims=True)            # [TB, 1]  (XLU)
    lse = jnp.log(sum_exp) + row_max                    # [TB, 1]

    # log(1 + sum_neg * exp(-pos_logit)) == lse - pos_logit  (num_pos == 1).
    loss_ref[...] = lse - pos_logit


def sup_contrastive_loss(y_pred: jax.Array, y_true: jax.Array,
                         *, block_rows: int = 1024) -> jax.Array:
    """SupContrastive loss, reduction='mean'.

    y_pred: [B, C] float logits (f32 or bf16); y_true: [B] int class labels.
    Assumes exactly one in-range label per row (as the PyTorch module does).
    """
    B, C = y_pred.shape
    labels = y_true.astype(jnp.int32).reshape(B, 1)

    tb = _choose_tile_rows(B, C, block_rows)
    num_blocks = _cdiv(B, tb)
    out_rows = num_blocks * tb   # output itself is never ragged

    itemsize = jnp.dtype(y_pred.dtype).itemsize
    cost = pl.CostEstimate(
        flops=5 * B * C,
        transcendentals=B * C,
        bytes_accessed=B * C * itemsize + B * 4 + out_rows * 4,
    )

    per_row = pl.pallas_call(
        _supcon_kernel,
        grid=(num_blocks,),
        out_shape=jax.ShapeDtypeStruct((out_rows, 1), jnp.float32),
        in_specs=[
            pl.BlockSpec((tb, C), lambda i: (i, 0)),   # logits tile
            pl.BlockSpec((tb, 1), lambda i: (i, 0)),   # labels tile
        ],
        out_specs=pl.BlockSpec((tb, 1), lambda i: (i, 0)),
        compiler_params=pltpu.CompilerParams(
            dimension_semantics=("parallel",),
            vmem_limit_bytes=48 * 1024 * 1024,
        ),
        cost_estimate=cost,
    )(y_pred, labels)

    # reduction='mean' over the real rows (ragged-tile tail rows are dropped).
    return jnp.mean(per_row[:B, 0])


def _reference(y_pred, y_true):
    onehot = jax.nn.one_hot(y_true, y_pred.shape[1], dtype=jnp.float32)
    y_pred = y_pred.astype(jnp.float32)
    sum_neg = jnp.sum((1.0 - onehot) * jnp.exp(y_pred), axis=1, keepdims=True)
    sum_pos = onehot * jnp.exp(-y_pred)
    num_pos = jnp.sum(onehot, axis=1)
    loss = jnp.sum(jnp.log(1.0 + sum_neg * sum_pos), axis=1) / num_pos
    return jnp.mean(loss)


if __name__ == "__main__":
    key = jax.random.PRNGKey(0)

    # Small shapes consistent with the module: batch=8, num_classes=32.
    k1, k2 = jax.random.split(key)
    B, C = 8, 32
    y_pred = jax.random.normal(k1, (B, C), dtype=jnp.float32)
    y_true = jax.random.randint(k2, (B,), 0, C, dtype=jnp.int32)

    loss = jax.block_until_ready(sup_contrastive_loss(y_pred, y_true))
    ref = _reference(y_pred, y_true)
    assert jnp.allclose(loss, ref, rtol=1e-5, atol=1e-5), (loss, ref)

    # Ragged-batch path (B not a multiple of the tile) without any jnp.pad.
    k3, k4 = jax.random.split(k2)
    B2, C2 = 12, 32
    y_pred2 = jax.random.normal(k3, (B2, C2), dtype=jnp.float32)
    y_true2 = jax.random.randint(k4, (B2,), 0, C2, dtype=jnp.int32)

    loss2 = jax.block_until_ready(sup_contrastive_loss(y_pred2, y_true2))
    ref2 = _reference(y_pred2, y_true2)
    assert jnp.allclose(loss2, ref2, rtol=1e-5, atol=1e-5), (loss2, ref2)

    print("KERNEL_OK")
</pallas_src>

<mosaic_0001>
module attributes {stable_mosaic.version = 11 : i64} {
  func.func @_supcon_kernel(%arg0: i32, %arg1: memref<8x32xf32, #tpu.memory_space<vmem>>, %arg2: memref<8x1xi32, #tpu.memory_space<vmem>>, %arg3: memref<8x1xf32, #tpu.memory_space<vmem>>) attributes {dimension_semantics = [#tpu.dimension_semantics<parallel>], iteration_bounds = array<i64: 1>, scalar_prefetch = 0 : i64, scratch_operands = 0 : i64, tpu.core_type = #tpu.core_type<tc>, window_params = [{transform_indices = @transform_0, window_bounds = array<i64: 8, 32>}, {transform_indices = @transform_1, window_bounds = array<i64: 8, 1>}, {transform_indices = @transform_2, window_bounds = array<i64: 8, 1>}]} {
    %c0 = arith.constant 0 : index
    %c0_0 = arith.constant 0 : index
    %0 = vector.load %arg1[%c0, %c0_0] : memref<8x32xf32, #tpu.memory_space<vmem>>, vector<8x32xf32>
    %c0_1 = arith.constant 0 : index
    %c0_2 = arith.constant 0 : index
    %1 = vector.load %arg2[%c0_1, %c0_2] : memref<8x1xi32, #tpu.memory_space<vmem>>, vector<8x1xi32>
    %2 = tpu.iota {dimensions = array<i32: 1>} : vector<8x32xi32>
    %3 = vector.broadcast %1 : vector<8x1xi32> to vector<8x32xi32>
    %4 = arith.cmpi eq, %2, %3 : vector<8x32xi32>
    %cst = arith.constant 0.000000e+00 : f32
    %5 = vector.broadcast %cst : f32 to vector<8x32xf32>
    %6 = arith.select %4, %0, %5 : vector<8x32xi1>, vector<8x32xf32>
    %cst_3 = arith.constant dense<0.000000e+00> : vector<8xf32>
    %7 = vector.multi_reduction <add>, %6, %cst_3 [1] : vector<8x32xf32> to vector<8xf32>
    %8 = vector.shape_cast %7 : vector<8xf32> to vector<8x1xf32>
    %cst_4 = arith.constant dense<0xFF800000> : vector<8xf32>
    %9 = vector.multi_reduction <maximumf>, %0, %cst_4 [1] : vector<8x32xf32> to vector<8xf32>
    %10 = vector.shape_cast %9 : vector<8xf32> to vector<8x1xf32>
    %11 = vector.broadcast %10 : vector<8x1xf32> to vector<8x32xf32>
    %12 = arith.subf %0, %11 : vector<8x32xf32>
    %13 = math.exp %12 : vector<8x32xf32>
    %cst_5 = arith.constant dense<0.000000e+00> : vector<8xf32>
    %14 = vector.multi_reduction <add>, %13, %cst_5 [1] : vector<8x32xf32> to vector<8xf32>
    %15 = vector.shape_cast %14 : vector<8xf32> to vector<8x1xf32>
    %16 = math.log %15 : vector<8x1xf32>
    %17 = arith.addf %16, %10 : vector<8x1xf32>
    %18 = arith.subf %17, %8 : vector<8x1xf32>
    %c0_6 = arith.constant 0 : index
    %c0_7 = arith.constant 0 : index
    %19 = vector.load %arg3[%c0_6, %c0_7] : memref<8x1xf32, #tpu.memory_space<vmem>>, vector<8x1xf32>
    tpu.vector_store %arg3[%c0_6, %c0_7], %18 {strides = array<i32>} : memref<8x1xf32, #tpu.memory_space<vmem>>, vector<8x1xf32>,
    return
  }
  func.func @transform_0(%arg0: i32) -> (i32, i32) {
    %c0_i32 = arith.constant 0 : i32
    %c0_i32_0 = arith.constant 0 : i32
    return %arg0, %c0_i32 : i32, i32
  }
  func.func @transform_1(%arg0: i32) -> (i32, i32) {
    %c0_i32 = arith.constant 0 : i32
    %c0_i32_0 = arith.constant 0 : i32
    return %arg0, %c0_i32 : i32, i32
  }
  func.func @transform_2(%arg0: i32) -> (i32, i32) {
    %c0_i32 = arith.constant 0 : i32
    %c0_i32_0 = arith.constant 0 : i32
    return %arg0, %c0_i32 : i32, i32
  }
}

</mosaic_0001>

<llo_original>
// kernel: tpu_custom_call.1
$region0: #{tpu_custom_call.1}
  #allocation0 [shape = 'u32[]', space=smem, size = 0x4, offset = 0x4, fixed_abs, tag = 'smem constant byte address 0x4 - core index']
  #allocation1 [shape = 'u32[144,128]{1,0:T(1,128)}', space=vmem, size = 0x12000, scoped, tag = 'internal scratch']
  %s0 = inlined_call_operand.vmem [shape: f32[8,32], index: 0, kind: input, shape index: {}]
  %s1 = inlined_call_operand.vmem [shape: s32[8,1], index: 1, kind: input, shape index: {}]
  %s2 = inlined_call_operand.vmem [shape: f32[8,1], index: 2, kind: output, shape index: {}]
  %s3 = sld [smem:[#allocation0]]
  $region18: #{tpu_custom_call.1} parent=0
    _
  %s5 = ssub.s32 1, %s3
  %s6 = scalar_select 0, %s5, %s3
  // Predicated region
  $region2: #{tpu_custom_call.1} parent=0 // pred_check
    _
  $region3: #{tpu_custom_call.1} parent=0 // pred_check_branch
    %8 = sbr.rel (0) target = $region5
  $region4: #{tpu_custom_call.1} parent=0 // pred_region
    _
  $region5: #{tpu_custom_call.1} parent=0 // pred_fallthru
    _
  // Predicated region
  $region6: #{tpu_custom_call.1} parent=0 // pred_check
    _
  $region7: #{tpu_custom_call.1} parent=0 // pred_check_branch
    %10 = sbr.rel (0) target = $region9
  $region8: #{tpu_custom_call.1} parent=0 // pred_region
    _
  $region9: #{tpu_custom_call.1} parent=0 // pred_fallthru
    _
  %v11 = vld [vmem:[%s0] sm:$0xff]
  %v12 = vld [vmem:[%s1] sm:$0xff]
  %v13 = vlaneseq
  %v14 = vand.u32 %v13, 127
  %15 = vset.pattern.permute.xlu0 0
  %16 = vperm.xlu0 %15, %v12
  %v17 = vpop.permute.xlu0 %16
  %vm18 = vcmp.eq.s32.totalorder %v14, %v17
  %v19 = vsel %vm18, %v11, 0.0
  %vm20 = vcmask 261120
  %v21 = vsel %vm20, %v19, 0.0
  %22 = vadd.xlane.f32.xlu0 %v21
  %v23 = vpop.xlane.xlu0 %22
  %v24 = vsel %vm20, %v11, -inf
  %25 = vmax.xlane.f32.xlu0 %v24
  %v26 = vpop.xlane.xlu0 %25
  %v27 = vsub.f32 %v11, %v26
  %v28 = vmul.f32 %v27, 1.442695
  %v29 = vpow.pop %v28
  %v30 = vsel %vm20, %v29, 0.0
  %31 = vadd.xlane.f32.xlu0 %v30
  %v32 = vpop.xlane.xlu0 %31
  %v33 = vlog2.pop %v32
  %v34 = vmul.f32 %v33, 0.6931472
  %v35 = vadd.f32 %v34, %v26
  %v36 = vsub.f32 %v35, %v23
  %vm37 = vcmask 7168
  %38 = vst.msk [vmem:[%s2] sm:$0xff] %vm37, %v36
  // Predicated region
  $region10: #{tpu_custom_call.1} parent=0 // pred_check
    _
  $region11: #{tpu_custom_call.1} parent=0 // pred_check_branch
    %40 = sbr.rel (0) target = $region13
  $region12: #{tpu_custom_call.1} parent=0 // pred_region
    _
  $region13: #{tpu_custom_call.1} parent=0 // pred_fallthru
    _
  // Predicated region
  $region14: #{tpu_custom_call.1} parent=0 // pred_check
    _
  $region15: #{tpu_custom_call.1} parent=0 // pred_check_branch
    %42 = sbr.rel (0) target = $region17
  $region16: #{tpu_custom_call.1} parent=0 // pred_region
    _
  $region17: #{tpu_custom_call.1} parent=0 // pred_fallthru
    _

</llo_original>
